<compile_context>
chip_gen: v7x
topology: tpu7x:2x2x1
jax: 0.10.0
libtpu: 0.0.40
codegen_flags: <defaults>
</compile_context>

<pallas_src>
import functools

import jax
import jax.numpy as jnp
from jax.experimental import pallas as pl
from jax.experimental.pallas import tpu as pltpu

F32 = jnp.float32
BF16 = jnp.bfloat16


def _cparams(dims, vmem_mb=48):
    return pltpu.CompilerParams(
        dimension_semantics=dims,
        vmem_limit_bytes=vmem_mb * 1024 * 1024,
    )


# --------------------------------------------------------------------------
# Linear kernel: y = x @ w + b (weights may be bf16), grid tiles N.
# --------------------------------------------------------------------------
def _linear_kernel(x_ref, w_ref, b_ref, o_ref, *, relu):
    x = x_ref[...].astype(w_ref.dtype)
    y = jnp.dot(x, w_ref[...], preferred_element_type=jnp.float32) + b_ref[...]
    if relu:
        y = jnp.maximum(y, 0.0)
    o_ref[...] = y.astype(o_ref.dtype)


def linear(x, w, b, *, tile_n=None, relu=False, vmem_mb=48):
    B, K = x.shape
    _, N = w.shape
    if tile_n is None or tile_n >= N:
        tile_n = N
    assert N % tile_n == 0
    return pl.pallas_call(
        functools.partial(_linear_kernel, relu=relu),
        out_shape=jax.ShapeDtypeStruct((B, N), F32),
        grid=(N // tile_n,),
        in_specs=[
            pl.BlockSpec((B, K), lambda j: (0, 0)),
            pl.BlockSpec((K, tile_n), lambda j: (0, j)),
            pl.BlockSpec((1, tile_n), lambda j: (0, j)),
        ],
        out_specs=pl.BlockSpec((B, tile_n), lambda j: (0, j)),
        compiler_params=_cparams(("parallel",), vmem_mb),
    )(x, w, b.reshape(1, N))


# --------------------------------------------------------------------------
# Fused policy head: actions_value = relu(x @ w1 + b1) @ w2 + b2
# --------------------------------------------------------------------------
def _policy_head_kernel(x_ref, w1_ref, b1_ref, w2_ref, b2_ref, o_ref):
    h = jnp.dot(x_ref[...], w1_ref[...], preferred_element_type=jnp.float32)
    h = jnp.maximum(h + b1_ref[...], 0.0)
    y = jnp.dot(h, w2_ref[...], preferred_element_type=jnp.float32) + b2_ref[...]
    o_ref[...] = y.astype(o_ref.dtype)


def policy_head(x, w1, b1, w2, b2):
    B = x.shape[0]
    A = w2.shape[1]
    return pl.pallas_call(
        _policy_head_kernel,
        out_shape=jax.ShapeDtypeStruct((B, A), F32),
    )(x, w1, b1.reshape(1, -1), w2, b2.reshape(1, -1))


# --------------------------------------------------------------------------
# LSTM gate matmul kernel: gates = x @ wx + h @ wh + b   (N tiled, bf16 weights)
# --------------------------------------------------------------------------
def _gates_kernel(x_ref, h_ref, wx_ref, wh_ref, b_ref, o_ref):
    x = x_ref[...].astype(wx_ref.dtype)
    h = h_ref[...].astype(wh_ref.dtype)
    y = jnp.dot(x, wx_ref[...], preferred_element_type=jnp.float32)
    y = y + jnp.dot(h, wh_ref[...], preferred_element_type=jnp.float32)
    o_ref[...] = y + b_ref[...]


def lstm_gates(x, h, wx, wh, b, *, tile_n=2048):
    B, K = x.shape
    _, H = h.shape
    N = wx.shape[1]
    assert N % tile_n == 0
    return pl.pallas_call(
        _gates_kernel,
        out_shape=jax.ShapeDtypeStruct((B, N), F32),
        grid=(N // tile_n,),
        in_specs=[
            pl.BlockSpec((B, K), lambda j: (0, 0)),
            pl.BlockSpec((B, H), lambda j: (0, 0)),
            pl.BlockSpec((K, tile_n), lambda j: (0, j)),
            pl.BlockSpec((H, tile_n), lambda j: (0, j)),
            pl.BlockSpec((1, tile_n), lambda j: (0, j)),
        ],
        out_specs=pl.BlockSpec((B, tile_n), lambda j: (0, j)),
        compiler_params=_cparams(("parallel",), 56),
    )(x, h, wx, wh, b.reshape(1, N))


# --------------------------------------------------------------------------
# LSTM pointwise kernel (PyTorch gate order: i, f, g, o)
# --------------------------------------------------------------------------
def _lstm_pointwise_kernel(g_ref, c_ref, h_out_ref, c_out_ref):
    H = c_ref.shape[1]
    g = g_ref[...]
    sig = lambda t: 1.0 / (1.0 + jnp.exp(-t))
    i = sig(g[:, 0:H])
    f = sig(g[:, H:2 * H])
    gg = jnp.tanh(g[:, 2 * H:3 * H])
    o = sig(g[:, 3 * H:4 * H])
    c_new = f * c_ref[...] + i * gg
    c_out_ref[...] = c_new
    h_out_ref[...] = o * jnp.tanh(c_new)


def lstm_cell(x, hx, cx, wx, wh, b):
    gates = lstm_gates(x, hx, wx, wh, b)
    return pl.pallas_call(
        _lstm_pointwise_kernel,
        out_shape=(jax.ShapeDtypeStruct(hx.shape, F32),
                   jax.ShapeDtypeStruct(cx.shape, F32)),
    )(gates, cx)


# --------------------------------------------------------------------------
# Fused conv2d (stride 1) -> maxpool 2x2 (floor) -> ReLU, NHWC layout.
#
# The input is re-packed outside the kernel as (.., W/2, 2*Cin) (a free reshape
# of contiguous NHWC), so even/odd output columns become the two column halves
# of a single phase-split weight matrix: each grid step does KH matmuls of shape
# (2R*W2p, NP*2*Cin) x (NP*2*Cin, 2*Cout) and the W-direction pool is just an
# elementwise max of the two halves.  Overlapping row windows (conv halo) are
# materialized outside the kernel so every grid step gets a private block.
# Pooling is done before bias+ReLU (commutes: bias is constant, ReLU monotone).
# --------------------------------------------------------------------------
def _conv_pool_relu_kernel(x_ref, w_ref, b_ref, o_ref, *, KH, NP, Cin, R):
    Cout = o_ref.shape[-1]
    W2p = o_ref.shape[-2]
    rows = x_ref[0]                                      # (2R+KH-1, PAIRS, 2*Cin)
    M = 2 * R * W2p
    K = NP * 2 * Cin
    acc = jnp.zeros((M, 2 * Cout), jnp.float32)
    for kh in range(KH):
        slab = rows[kh:kh + 2 * R]                       # (2R, PAIRS, 2*Cin)
        patch = jnp.concatenate(
            [slab[:, q:q + W2p, :] for q in range(NP)], axis=-1)   # (2R, W2p, K)
        acc = acc + jnp.dot(patch.reshape(M, K), w_ref[kh],
                            preferred_element_type=jnp.float32)
    acc = acc.reshape(2 * R, W2p, 2 * Cout)
    m = jnp.maximum(acc[..., :Cout], acc[..., Cout:])    # 2x pool along W (even/odd cols)
    m = jnp.max(m.reshape(R, 2, W2p, Cout), axis=1)      # 2x pool along H
    o_ref[0] = jnp.maximum(m + b_ref[0], 0.0)            # bias + fused ReLU


def conv2d_pool_relu(x, w_hwio, b, *, padding, rows_per_step=8):
    B, H, W, Cin = x.shape
    KH, KW, _, Cout = w_hwio.shape
    H_out = H + 2 * padding - KH + 1
    W_out = W + 2 * padding - KW + 1
    H2, W2 = H_out // 2, W_out // 2
    NP = (KW + 2) // 2                 # paired input columns covering a KW window
    R = min(rows_per_step, H2)         # pooled output rows per grid step
    HB = -(-H2 // R)                   # row blocks per image
    W2p = -(-W2 // 8) * 8              # pooled cols rounded up: keeps reshapes layout-free
    PAIRS = W2p + NP - 1
    TW = 2 * PAIRS                     # working (padded/cropped) input width
    RW = 2 * R + KH - 1                # input rows per step (incl. halo)
    TH = HB * 2 * R + KH - 1           # working input height

    pad_b = max(TH - H - padding, 0)
    pad_r = max(TW - W - padding, 0)
    xp = jnp.pad(x, ((0, 0), (padding, pad_b), (padding, pad_r), (0, 0)))
    xp = xp[:, :TH, :TW, :].reshape(B, TH, PAIRS, 2 * Cin)

    # materialize overlapping row windows (halo) -> one private block per grid step
    xw = jnp.stack([xp[:, i * 2 * R: i * 2 * R + RW] for i in range(HB)], axis=1)
    xw = xw.reshape(B * HB, RW, PAIRS, 2 * Cin)

    # phase-split weights: [:, :, :Cout] -> even output cols, [:, :, Cout:] -> odd.
    # rows ordered (pair q, sub-column s, cin), matching the packed input layout.
    wq = jnp.zeros((KH, NP, 2, Cin, 2, Cout), w_hwio.dtype)
    for p in range(2):
        for q in range(NP):
            for s in range(2):
                kw = 2 * q + s - p
                if 0 <= kw < KW:
                    wq = wq.at[:, q, s, :, p, :].set(w_hwio[:, kw])
    wq = wq.reshape(KH, NP * 2 * Cin, 2 * Cout)

    out = pl.pallas_call(
        functools.partial(_conv_pool_relu_kernel, KH=KH, NP=NP, Cin=Cin, R=R),
        out_shape=jax.ShapeDtypeStruct((B * HB, R, W2p, Cout), F32),
        grid=(B * HB,),
        in_specs=[
            pl.BlockSpec((1, RW, PAIRS, 2 * Cin), lambda i: (i, 0, 0, 0)),
            pl.BlockSpec((KH, NP * 2 * Cin, 2 * Cout), lambda i: (0, 0, 0)),
            pl.BlockSpec((1, Cout), lambda i: (0, 0)),
        ],
        out_specs=pl.BlockSpec((1, R, W2p, Cout), lambda i: (i, 0, 0, 0)),
        compiler_params=_cparams(("parallel",)),
    )(xw, wq, b.reshape(1, Cout))
    return out.reshape(B, HB * R, W2p, Cout)[:, :H2, :W2, :]


# --------------------------------------------------------------------------
# Bit-mask kernel (lane-dense (B, H, W*C) view, exact int32 arithmetic):
#   out = ((img // 17) & bit) == bit ? 1.0 : 0.0   (or raw image if action >= 7)
# --------------------------------------------------------------------------
def _bitmask_kernel(s_ref, x_ref, o_ref):
    x = x_ref[...]                                  # int32, non-negative
    bit = s_ref[0]
    q = x // 17                                     # exact integer division
    hit = jnp.bitwise_and(q, bit) == bit
    masked = jnp.where(hit, 1.0, 0.0).astype(jnp.float32)
    o_ref[...] = jnp.where(s_ref[1] == 1, masked, x.astype(jnp.float32))


def bitmask_image(decoded_int, bit, apply_mask):
    B, H, W, C = decoded_int.shape
    x2 = decoded_int.reshape(B, H, W * C)           # lane-dense view (768 lanes)
    scalars = jnp.stack([bit.astype(jnp.int32), apply_mask.astype(jnp.int32)])
    grid_spec = pltpu.PrefetchScalarGridSpec(
        num_scalar_prefetch=1,
        grid=(B,),
        in_specs=[pl.BlockSpec((1, H, W * C), lambda bb, s: (bb, 0, 0))],
        out_specs=pl.BlockSpec((1, H, W * C), lambda bb, s: (bb, 0, 0)),
    )
    out = pl.pallas_call(
        _bitmask_kernel,
        out_shape=jax.ShapeDtypeStruct((B, H, W * C), F32),
        grid_spec=grid_spec,
        compiler_params=_cparams(("parallel",)),
    )(scalars, x2)
    return out.reshape(B, H, W, C)


# --------------------------------------------------------------------------
# Parameters (deterministic, shapes from the module's __init__; biases = 0)
# --------------------------------------------------------------------------
def _uniform(key, shape, bound):
    return jax.random.uniform(key, shape, F32, -bound, bound)


def init_params(key, action_space=7, in_channels=3, latent_dim=1000):
    keys = jax.random.split(key, 16)
    p = {}
    p["fc1_w"] = _uniform(keys[0], (latent_dim, 128), (6.0 / (latent_dim + 128)) ** 0.5)
    p["fc1_b"] = jnp.zeros((128,), F32)
    p["outa_w"] = _uniform(keys[1], (128, action_space),
                           (6.0 / (128 + action_space)) ** 0.5)
    p["outa_b"] = jnp.zeros((action_space,), F32)
    # TODO(synk): `autoencoder.decode` is an external frozen model passed into
    # __init__; substituted by a deterministic synthetic decoder (bf16 weights).
    p["dec_w"] = (0.05 * jax.random.normal(keys[2], (latent_dim, 32 * 32 * 3), F32)).astype(BF16)

    conv_defs = [(in_channels, 32, 5), (32, 32, 5), (32, 64, 4), (64, 64, 3), (64, 64, 3)]
    relu_gain = 2.0 ** 0.5
    for idx, (cin, cout, k) in enumerate(conv_defs, start=1):
        fan_in, fan_out = cin * k * k, cout * k * k
        bound = (6.0 / (fan_in + fan_out)) ** 0.5
        p[f"conv{idx}_w"] = relu_gain * _uniform(keys[2 + idx], (k, k, cin, cout), bound)  # HWIO
        p[f"conv{idx}_b"] = jnp.zeros((cout,), F32)

    hidden, feat = 1024, 64 * 7 * 7
    s = 1.0 / (hidden ** 0.5)
    wx = _uniform(keys[8], (feat, 4 * hidden), s)      # rows in PyTorch NCHW-flatten order
    # Pre-permute rows to NHWC flatten order so the conv output can be fed to the
    # LSTM without a transpose: permuted row (h*7*64 + w*64 + c) == original row
    # (c*49 + h*7 + w).  Equivalent to PyTorch's x.view(B, -1) on NCHW.
    idx = jnp.arange(feat)
    h_i = idx // (7 * 64)
    w_i = (idx % (7 * 64)) // 64
    c_i = idx % 64
    p["lstm_wx"] = wx[c_i * 49 + h_i * 7 + w_i].astype(BF16)
    p["lstm_wh"] = _uniform(keys[9], (hidden, 4 * hidden), s).astype(BF16)
    p["lstm_b"] = jnp.zeros((4 * hidden,), F32)        # bias_ih + bias_hh, both zeroed
    p["out_w"] = (0.1 * jax.random.normal(keys[10], (hidden, 256 * 256), F32)).astype(BF16)
    p["out_b"] = jnp.zeros((256 * 256,), F32)
    return p


# --------------------------------------------------------------------------
# Forward pass
# --------------------------------------------------------------------------
def net_forward(params, latent, hx, cx):
    B = latent.shape[0]

    # policy head (single fused kernel): out_action(relu(fc1(latent)))
    actions_value = policy_head(latent, params["fc1_w"], params["fc1_b"],
                                params["outa_w"], params["outa_b"])
    action = jnp.argmax(actions_value[0])                # torch.max(av, 1)[1][0]

    # TODO(synk): external frozen autoencoder.decode replaced by a deterministic
    # synthetic decoder (bf16 linear -> sigmoid -> 8x nearest upsample) -> int image.
    dec = jnp.dot(latent.astype(BF16), params["dec_w"],
                  preferred_element_type=jnp.float32)
    dec = jax.nn.sigmoid(dec) * 255.0
    dec = dec.reshape(B, 32, 32, 3)
    dec = jnp.repeat(jnp.repeat(dec, 8, axis=1), 8, axis=2)      # (B,256,256,3)
    dec_int = jnp.clip(dec, 0, 255).astype(jnp.int32)

    # action -> bit (0:2, 1:4, 2:1, 3..6:8); action >= 7 keeps the raw image
    bit_table = jnp.array([2, 4, 1, 8, 8, 8, 8], dtype=jnp.int32)
    bit = bit_table[jnp.minimum(action, 6)]
    x = bitmask_image(dec_int, bit, action < 7)

    # conv trunk (NHWC): 5 x [conv -> maxpool2x2 -> relu], pool + relu fused in-kernel
    x = conv2d_pool_relu(x, params["conv1_w"], params["conv1_b"], padding=2)
    x = conv2d_pool_relu(x, params["conv2_w"], params["conv2_b"], padding=1)
    x = conv2d_pool_relu(x, params["conv3_w"], params["conv3_b"], padding=1)
    x = conv2d_pool_relu(x, params["conv4_w"], params["conv4_b"], padding=1)
    x = conv2d_pool_relu(x, params["conv5_w"], params["conv5_b"], padding=1)

    # flatten in NHWC order (lstm_wx rows were pre-permuted to match NCHW flatten)
    x = x.reshape(B, -1)

    hx_new, cx_new = lstm_cell(x, hx, cx,
                               params["lstm_wx"], params["lstm_wh"], params["lstm_b"])
    recon = linear(hx_new, params["out_w"], params["out_b"], tile_n=8192, vmem_mb=56)
    return actions_value, recon, (hx_new, cx_new)


if __name__ == "__main__":
    key = jax.random.PRNGKey(0)
    action_space = 7
    B = 2

    params = init_params(key, action_space=action_space)
    k_in, _ = jax.random.split(jax.random.PRNGKey(0))
    latent = jax.random.normal(k_in, (B, 1000), dtype=F32)
    hx = jnp.zeros((B, 1024), F32)
    cx = jnp.zeros((B, 1024), F32)

    actions_value, recon, (hx_n, cx_n) = net_forward(params, latent, hx, cx)
    jax.block_until_ready((actions_value, recon, hx_n, cx_n))

    assert actions_value.shape == (B, action_space)
    assert recon.shape == (B, 256 * 256)
    assert hx_n.shape == (B, 1024) and cx_n.shape == (B, 1024)
    assert jnp.all(jnp.isfinite(actions_value)) and jnp.all(jnp.isfinite(recon))
    print("KERNEL_OK")
</pallas_src>

<mosaic_0001>
module attributes {stable_mosaic.version = 11 : i64} {
  func.func @_policy_head_kernel(%arg0: memref<2x1000xf32, #tpu.memory_space<vmem>>, %arg1: memref<1000x128xf32, #tpu.memory_space<vmem>>, %arg2: memref<1x128xf32, #tpu.memory_space<vmem>>, %arg3: memref<128x7xf32, #tpu.memory_space<vmem>>, %arg4: memref<1x7xf32, #tpu.memory_space<vmem>>, %arg5: memref<2x7xf32, #tpu.memory_space<vmem>>) attributes {dimension_semantics = [], scalar_prefetch = 0 : i64, scratch_operands = 0 : i64, tpu.core_type = #tpu.core_type<tc>} {
    %c0 = arith.constant 0 : index
    %c0_0 = arith.constant 0 : index
    %0 = vector.load %arg0[%c0, %c0_0] : memref<2x1000xf32, #tpu.memory_space<vmem>>, vector<2x1000xf32>
    %c0_1 = arith.constant 0 : index
    %c0_2 = arith.constant 0 : index
    %1 = vector.load %arg1[%c0_1, %c0_2] : memref<1000x128xf32, #tpu.memory_space<vmem>>, vector<1000x128xf32>
    %cst = arith.constant dense<0.000000e+00> : vector<2x128xf32>
    %2 = tpu.matmul %0, %1, %cst {dimension_numbers = #tpu.dot_dimension_numbers<[1], [0], [0], [1], [0, 0, 1, 1], [], []>} : vector<2x1000xf32>, vector<1000x128xf32>, vector<2x128xf32> -> vector<2x128xf32>
    %c0_3 = arith.constant 0 : index
    %c0_4 = arith.constant 0 : index
    %3 = vector.load %arg2[%c0_3, %c0_4] : memref<1x128xf32, #tpu.memory_space<vmem>>, vector<1x128xf32>
    %4 = vector.broadcast %3 : vector<1x128xf32> to vector<2x128xf32>
    %5 = arith.addf %2, %4 : vector<2x128xf32>
    %cst_5 = arith.constant 0.000000e+00 : f32
    %6 = vector.broadcast %cst_5 : f32 to vector<2x128xf32>
    %7 = arith.maximumf %5, %6 : vector<2x128xf32>
    %c0_6 = arith.constant 0 : index
    %c0_7 = arith.constant 0 : index
    %8 = vector.load %arg3[%c0_6, %c0_7] : memref<128x7xf32, #tpu.memory_space<vmem>>, vector<128x7xf32>
    %cst_8 = arith.constant dense<0.000000e+00> : vector<2x7xf32>
    %9 = tpu.matmul %7, %8, %cst_8 {dimension_numbers = #tpu.dot_dimension_numbers<[1], [0], [0], [1], [0, 0, 1, 1], [], []>} : vector<2x128xf32>, vector<128x7xf32>, vector<2x7xf32> -> vector<2x7xf32>
    %c0_9 = arith.constant 0 : index
    %c0_10 = arith.constant 0 : index
    %10 = vector.load %arg4[%c0_9, %c0_10] : memref<1x7xf32, #tpu.memory_space<vmem>>, vector<1x7xf32>
    %11 = vector.broadcast %10 : vector<1x7xf32> to vector<2x7xf32>
    %12 = arith.addf %9, %11 : vector<2x7xf32>
    %c0_11 = arith.constant 0 : index
    %c0_12 = arith.constant 0 : index
    %13 = vector.load %arg5[%c0_11, %c0_12] : memref<2x7xf32, #tpu.memory_space<vmem>>, vector<2x7xf32>
    tpu.vector_store %arg5[%c0_11, %c0_12], %12 {strides = array<i32>} : memref<2x7xf32, #tpu.memory_space<vmem>>, vector<2x7xf32>,
    return
  }
}

</mosaic_0001>

<llo_original>
// kernel: tpu_custom_call.1
$region0: #{tpu_custom_call.1}
  #allocation0 [shape = 'u32[]', space=smem, size = 0x4, offset = 0x4, fixed_abs, tag = 'smem constant byte address 0x4 - core index']
  #allocation1 [shape = 'u32[144,128]{1,0:T(1,128)}', space=vmem, size = 0x12000, scoped, tag = 'internal scratch']
  %s0 = inlined_call_operand.vmem [shape: f32[2,1000], index: 0, kind: input, shape index: {}]
  %s1 = inlined_call_operand.hbm [shape: f32[1000,128], index: 1, kind: input, shape index: {}]
  %s2 = inlined_call_operand.vmem [shape: f32[1,128], index: 2, kind: input, shape index: {}]
  %s3 = inlined_call_operand.vmem [shape: f32[128,7], index: 3, kind: input, shape index: {}]
  %s4 = inlined_call_operand.vmem [shape: f32[1,7], index: 4, kind: input, shape index: {}]
  %s5 = inlined_call_operand.hbm [shape: f32[2,7], index: 5, kind: output, shape index: {}]
  %s6 = sld [smem:[#allocation0]]
  $region34: #{tpu_custom_call.1} parent=0
    _
  %s8 = ssub.s32 1, %s6
  %s9 = scalar_select 0, %s8, %s6
  $region1: #{tpu_custom_call.1} parent=0
    #allocation2 [shape = 'u8[512000]{0}', space=vmem, size = 0x7d000, scoped, tag = 'input window, operand 1, single buffered']
    #allocation3 [shape = 's32[1]{0}', space=sflag, size = 0x4, scoped, tag = 'scoped memory for tpu_custom_call.1']
    #allocation4 [shape = 's32[1]{0}', space=sflag, size = 0x4, scoped, tag = 'scoped memory for tpu_custom_call.1']
    #allocation5 [shape = 'u8[1024]{0}', space=vmem, size = 0x400, scoped, tag = 'output window, operand 0, single buffered']
    %10 = vsyncpa [#allocation3], 0
    %11 = vsyncpa [#allocation4], 0
    // Predicated region
    $region2: #{tpu_custom_call.1} parent=1 // pred_check
      _
    $region3: #{tpu_custom_call.1} parent=1 // pred_check_branch
      %13 = sbr.rel (0) target = $region5
    $region4: #{tpu_custom_call.1} parent=1 // pred_region
      _
    $region5: #{tpu_custom_call.1} parent=1 // pred_fallthru
      _
    // Predicated region
    $region6: #{tpu_custom_call.1} parent=1 // pred_check
      _
    $region7: #{tpu_custom_call.1} parent=1 // pred_check_branch
      %15 = sbr.rel (0) target = $region9
    $region8: #{tpu_custom_call.1} parent=1 // pred_region
      %s17 = ssub.s32 16000, 16000
      %18 = vsyncadd [#allocation3], %s17
      %s19 = sshll.u32 [#allocation2], 4
      %s20 = int_to_ptr.vmem [resolvable:$true] %s19
      %25 = dma.hbm_to_vmem [thread:$0]  %s1, 16000, %s20, [#allocation3], 128, 128, 8
    $region9: #{tpu_custom_call.1} parent=1 // pred_fallthru
      _
    // Predicated region
    $region10: #{tpu_custom_call.1} parent=1 // pred_check
      _
    $region11: #{tpu_custom_call.1} parent=1 // pred_check_branch
      %27 = sbr.rel (0) target = $region13
    $region12: #{tpu_custom_call.1} parent=1 // pred_region
      _
    $region13: #{tpu_custom_call.1} parent=1 // pred_fallthru
      _
    // Predicated region
    $region14: #{tpu_custom_call.1} parent=1 // pred_check
      _
    $region15: #{tpu_custom_call.1} parent=1 // pred_check_branch
      %29 = sbr.rel (0) target = $region17
    $region16: #{tpu_custom_call.1} parent=1 // pred_region
      _
    $region17: #{tpu_custom_call.1} parent=1 // pred_fallthru
      _
    // Predicated region
    $region18: #{tpu_custom_call.1} parent=1 // pred_check
      _
    $region19: #{tpu_custom_call.1} parent=1 // pred_check_branch
      %31 = sbr.rel (0) target = $region21
    $region20: #{tpu_custom_call.1} parent=1 // pred_region
      _
    $region21: #{tpu_custom_call.1} parent=1 // pred_fallthru
      _
    // Predicated region
    $region22: #{tpu_custom_call.1} parent=1 // pred_check
      _
    $region23: #{tpu_custom_call.1} parent=1 // pred_check_branch
      %33 = sbr.rel (0) target = $region25
    $region24: #{tpu_custom_call.1} parent=1 // pred_region
      %34 = dma.done [#allocation3], 16000
    $region25: #{tpu_custom_call.1} parent=1 // pred_fallthru
      _
    %v35 = vld [vmem:[%s0] sm:$0xff]
    %v36 = vld [vmem:[%s0 + $0x8] sm:$0xff]
    %v37 = vld [vmem:[#allocation2] sm:$0xff]
    %v38 = vld [vmem:[#allocation2 + $0x8] sm:$0xff]
    %v39 = vld [vmem:[#allocation2 + $0x10] sm:$0xff]
    %v40 = vld [vmem:[#allocation2 + $0x18] sm:$0xff]
    %v41 = vld [vmem:[#allocation2 + $0x20] sm:$0xff]
    %v42 = vld [vmem:[#allocation2 + $0x28] sm:$0xff]
    %v43 = vld [vmem:[#allocation2 + $0x30] sm:$0xff]
    %v44 = vld [vmem:[#allocation2 + $0x38] sm:$0xff]
    %v45 = vld [vmem:[#allocation2 + $0x40] sm:$0xff]
    %v46 = vld [vmem:[#allocation2 + $0x48] sm:$0xff]
    %v47 = vld [vmem:[#allocation2 + $0x50] sm:$0xff]
    %v48 = vld [vmem:[#allocation2 + $0x58] sm:$0xff]
    %v49 = vld [vmem:[#allocation2 + $0x60] sm:$0xff]
    %v50 = vld [vmem:[#allocation2 + $0x68] sm:$0xff]
    %v51 = vld [vmem:[#allocation2 + $0x70] sm:$0xff]
    %v52 = vld [vmem:[#allocation2 + $0x78] sm:$0xff]
    %v53 = vld [vmem:[#allocation2 + $0x80] sm:$0xff]
    %v54 = vld [vmem:[#allocation2 + $0x88] sm:$0xff]
    %v55 = vld [vmem:[#allocation2 + $0x90] sm:$0xff]
    %v56 = vld [vmem:[#allocation2 + $0x98] sm:$0xff]
    %v57 = vld [vmem:[#allocation2 + $0xa0] sm:$0xff]
    %v58 = vld [vmem:[#allocation2 + $0xa8] sm:$0xff]
    %v59 = vld [vmem:[#allocation2 + $0xb0] sm:$0xff]
    %v60 = vld [vmem:[#allocation2 + $0xb8] sm:$0xff]
    %v61 = vld [vmem:[#allocation2 + $0xc0] sm:$0xff]
    %v62 = vld [vmem:[#allocation2 + $0xc8] sm:$0xff]
    %v63 = vld [vmem:[#allocation2 + $0xd0] sm:$0xff]
    %v64 = vld [vmem:[#allocation2 + $0xd8] sm:$0xff]
    %v65 = vld [vmem:[#allocation2 + $0xe0] sm:$0xff]
    %v66 = vld [vmem:[#allocation2 + $0xe8] sm:$0xff]
    %v67 = vld [vmem:[#allocation2 + $0xf0] sm:$0xff]
    %v68 = vld [vmem:[#allocation2 + $0xf8] sm:$0xff]
    %v69 = vld [vmem:[#allocation2 + $0x100] sm:$0xff]
    %v70 = vld [vmem:[#allocation2 + $0x108] sm:$0xff]
    %v71 = vld [vmem:[#allocation2 + $0x110] sm:$0xff]
    %v72 = vld [vmem:[#allocation2 + $0x118] sm:$0xff]
    %v73 = vld [vmem:[#allocation2 + $0x120] sm:$0xff]
    %v74 = vld [vmem:[#allocation2 + $0x128] sm:$0xff]
    %v75 = vld [vmem:[#allocation2 + $0x130] sm:$0xff]
    %v76 = vld [vmem:[#allocation2 + $0x138] sm:$0xff]
    %v77 = vld [vmem:[#allocation2 + $0x140] sm:$0xff]
    %v78 = vld [vmem:[#allocation2 + $0x148] sm:$0xff]
    %v79 = vld [vmem:[#allocation2 + $0x150] sm:$0xff]
    %v80 = vld [vmem:[#allocation2 + $0x158] sm:$0xff]
    %v81 = vld [vmem:[#allocation2 + $0x160] sm:$0xff]
    %v82 = vld [vmem:[#allocation2 + $0x168] sm:$0xff]
    %v83 = vld [vmem:[#allocation2 + $0x170] sm:$0xff]
    %v84 = vld [vmem:[#allocation2 + $0x178] sm:$0xff]
    %v85 = vld [vmem:[#allocation2 + $0x180] sm:$0xff]
    %v86 = vld [vmem:[#allocation2 + $0x188] sm:$0xff]
    %v87 = vld [vmem:[#allocation2 + $0x190] sm:$0xff]
    %v88 = vld [vmem:[#allocation2 + $0x198] sm:$0xff]
    %v89 = vld [vmem:[#allocation2 + $0x1a0] sm:$0xff]
    %v90 = vld [vmem:[#allocation2 + $0x1a8] sm:$0xff]
    %v91 = vld [vmem:[#allocation2 + $0x1b0] sm:$0xff]
    %v92 = vld [vmem:[#allocation2 + $0x1b8] sm:$0xff]
    %v93 = vld [vmem:[#allocation2 + $0x1c0] sm:$0xff]
    %v94 = vld [vmem:[#allocation2 + $0x1c8] sm:$0xff]
    %v95 = vld [vmem:[#allocation2 + $0x1d0] sm:$0xff]
    %v96 = vld [vmem:[#allocation2 + $0x1d8] sm:$0xff]
    %v97 = vld [vmem:[#allocation2 + $0x1e0] sm:$0xff]
    %v98 = vld [vmem:[#allocation2 + $0x1e8] sm:$0xff]
    %v99 = vld [vmem:[#allocation2 + $0x1f0] sm:$0xff]
    %v100 = vld [vmem:[#allocation2 + $0x1f8] sm:$0xff]
    %v101 = vld [vmem:[#allocation2 + $0x200] sm:$0xff]
    %v102 = vld [vmem:[#allocation2 + $0x208] sm:$0xff]
    %v103 = vld [vmem:[#allocation2 + $0x210] sm:$0xff]
    %v104 = vld [vmem:[#allocation2 + $0x218] sm:$0xff]
    %v105 = vld [vmem:[#allocation2 + $0x220] sm:$0xff]
    %v106 = vld [vmem:[#allocation2 + $0x228] sm:$0xff]
    %v107 = vld [vmem:[#allocation2 + $0x230] sm:$0xff]
    %v108 = vld [vmem:[#allocation2 + $0x238] sm:$0xff]
    %v109 = vld [vmem:[#allocation2 + $0x240] sm:$0xff]
    %v110 = vld [vmem:[#allocation2 + $0x248] sm:$0xff]
    %v111 = vld [vmem:[#allocation2 + $0x250] sm:$0xff]
    %v112 = vld [vmem:[#allocation2 + $0x258] sm:$0xff]
    %v113 = vld [vmem:[#allocation2 + $0x260] sm:$0xff]
    %v114 = vld [vmem:[#allocation2 + $0x268] sm:$0xff]
    %v115 = vld [vmem:[#allocation2 + $0x270] sm:$0xff]
    %v116 = vld [vmem:[#allocation2 + $0x278] sm:$0xff]
    %v117 = vld [vmem:[#allocation2 + $0x280] sm:$0xff]
    %v118 = vld [vmem:[#allocation2 + $0x288] sm:$0xff]
    %v119 = vld [vmem:[#allocation2 + $0x290] sm:$0xff]
    %v120 = vld [vmem:[#allocation2 + $0x298] sm:$0xff]
    %v121 = vld [vmem:[#allocation2 + $0x2a0] sm:$0xff]
    %v122 = vld [vmem:[#allocation2 + $0x2a8] sm:$0xff]
    %v123 = vld [vmem:[#allocation2 + $0x2b0] sm:$0xff]
    %v124 = vld [vmem:[#allocation2 + $0x2b8] sm:$0xff]
    %v125 = vld [vmem:[#allocation2 + $0x2c0] sm:$0xff]
    %v126 = vld [vmem:[#allocation2 + $0x2c8] sm:$0xff]
    %v127 = vld [vmem:[#allocation2 + $0x2d0] sm:$0xff]
    %v128 = vld [vmem:[#allocation2 + $0x2d8] sm:$0xff]
    %v129 = vld [vmem:[#allocation2 + $0x2e0] sm:$0xff]
    %v130 = vld [vmem:[#allocation2 + $0x2e8] sm:$0xff]
    %v131 = vld [vmem:[#allocation2 + $0x2f0] sm:$0xff]
    %v132 = vld [vmem:[#allocation2 + $0x2f8] sm:$0xff]
    %v133 = vld [vmem:[#allocation2 + $0x300] sm:$0xff]
    %v134 = vld [vmem:[#allocation2 + $0x308] sm:$0xff]
    %v135 = vld [vmem:[#allocation2 + $0x310] sm:$0xff]
    %v136 = vld [vmem:[#allocation2 + $0x318] sm:$0xff]
    %v137 = vld [vmem:[#allocation2 + $0x320] sm:$0xff]
    %v138 = vld [vmem:[#allocation2 + $0x328] sm:$0xff]
    %v139 = vld [vmem:[#allocation2 + $0x330] sm:$0xff]
    %v140 = vld [vmem:[#allocation2 + $0x338] sm:$0xff]
    %v141 = vld [vmem:[#allocation2 + $0x340] sm:$0xff]
    %v142 = vld [vmem:[#allocation2 + $0x348] sm:$0xff]
    %v143 = vld [vmem:[#allocation2 + $0x350] sm:$0xff]
    %v144 = vld [vmem:[#allocation2 + $0x358] sm:$0xff]
    %v145 = vld [vmem:[#allocation2 + $0x360] sm:$0xff]
    %v146 = vld [vmem:[#allocation2 + $0x368] sm:$0xff]
    %v147 = vld [vmem:[#allocation2 + $0x370] sm:$0xff]
    %v148 = vld [vmem:[#allocation2 + $0x378] sm:$0xff]
    %v149 = vld [vmem:[#allocation2 + $0x380] sm:$0xff]
    %v150 = vld [vmem:[#allocation2 + $0x388] sm:$0xff]
    %v151 = vld [vmem:[#allocation2 + $0x390] sm:$0xff]
    %v152 = vld [vmem:[#allocation2 + $0x398] sm:$0xff]
    %v153 = vld [vmem:[#allocation2 + $0x3a0] sm:$0xff]
    %v154 = vld [vmem:[#allocation2 + $0x3a8] sm:$0xff]
    %v155 = vld [vmem:[#allocation2 + $0x3b0] sm:$0xff]
    %v156 = vld [vmem:[#allocation2 + $0x3b8] sm:$0xff]
    %v157 = vld [vmem:[#allocation2 + $0x3c0] sm:$0xff]
    %v158 = vld [vmem:[#allocation2 + $0x3c8] sm:$0xff]
    %v159 = vld [vmem:[#allocation2 + $0x3d0] sm:$0xff]
    %v160 = vld [vmem:[#allocation2 + $0x3d8] sm:$0xff]
    %v161 = vld [vmem:[#allocation2 + $0x3e0] sm:$0xff]
    %v162 = vld [vmem:[%s2] sm:$0x1]
    %v164 = vlaneseq
    %v165 = vshrl.u32 %v164, 7
    %v166 = vsub.s32 0, %v165
    %v167 = vrot.slane %v162, %v166
    %v171 = vcombine.high %v35, %v35
    %v173 = vunpack.c.l.s4 1983009808
    %v174 = vunpack.c.0.s8 %v173
    %v175 = vlaneseq
    %v176 = vshrl.u32 %v175, 7
    %v177 = vsub.s32 %v174, %v176
    %v178 = vrot.slane %v35, %v177
    %v180 = vunpack.c.l.s4 1983009808
    %v181 = vunpack.c.0.s8 %v180
    %v182 = vlaneseq
    %v183 = vshrl.u32 %v182, 7
    %v184 = vsub.s32 %v181, %v183
    %v185 = vrot.slane %v171, %v184
    %v186 = vcombine.high %v178, %v178
    %v187 = vcombine.high %v185, %v185
    %v188 = vcombine.high %v36, %v36
    %v190 = vunpack.c.l.s4 1983009808
    %v191 = vunpack.c.0.s8 %v190
    %v192 = vlaneseq
    %v193 = vshrl.u32 %v192, 7
    %v194 = vsub.s32 %v191, %v193
    %v195 = vrot.slane %v36, %v194
    %v197 = vunpack.c.l.s4 1983009808
    %v198 = vunpack.c.0.s8 %v197
    %v199 = vlaneseq
    %v200 = vshrl.u32 %v199, 7
    %v201 = vsub.s32 %v198, %v200
    %v202 = vrot.slane %v188, %v201
    %v203 = vcombine.high %v195, %v195
    %v204 = vcombine.high %v202, %v202
    %vm212 = vcmask 850944
    %v213 = vsel %vm212, %v204, 0
    %215 = vmatprep.subr.mxu0 0.0
    %216 = vmatpush1.msra.mxu0 %v37
    %217 = vmatprep.subr.mxu0 0.0
    %218 = vmatpush1.msra.mxu0 %v38
    %219 = vmatprep.subr.mxu0 0.0
    %220 = vmatpush1.msra.mxu0 %v39
    %221 = vmatprep.subr.mxu0 0.0
    %222 = vmatpush1.msra.mxu0 %v40
    %223 = vmatprep.subr.mxu0 0.0
    %224 = vmatpush1.msra.mxu0 %v41
    %225 = vmatprep.subr.mxu0 0.0
    %226 = vmatpush1.msra.mxu0 %v42
    %227 = vmatprep.subr.mxu0 0.0
    %228 = vmatpush1.msra.mxu0 %v43
    %229 = vmatprep.subr.mxu0 0.0
    %230 = vmatpush1.msra.mxu0 %v44
    %231 = vmatprep.subr.mxu0 0.0
    %232 = vmatpush1.msra.mxu0 %v45
    %233 = vmatprep.subr.mxu0 0.0
    %234 = vmatpush1.msra.mxu0 %v46
    %235 = vmatprep.subr.mxu0 0.0
    %236 = vmatpush1.msra.mxu0 %v47
    %237 = vmatprep.subr.mxu0 0.0
    %238 = vmatpush1.msra.mxu0 %v48
    %239 = vmatprep.subr.mxu0 0.0
    %240 = vmatpush1.msra.mxu0 %v49
    %241 = vmatprep.subr.mxu0 0.0
    %242 = vmatpush1.msra.mxu0 %v50
    %243 = vmatprep.subr.mxu0 0.0
    %244 = vmatpush1.msra.mxu0 %v51
    %245 = vmatprep.subr.mxu0 0.0
    %246 = vmatpush1.msra.mxu0 %v52
    %247 = vmatprep.subr.mxu0 0.0
    %248 = vmatpush1.msra.mxu0 %v53
    %249 = vmatprep.subr.mxu0 0.0
    %250 = vmatpush1.msra.mxu0 %v54
    %251 = vmatprep.subr.mxu0 0.0
    %252 = vmatpush1.msra.mxu0 %v55
    %253 = vmatprep.subr.mxu0 0.0
    %254 = vmatpush1.msra.mxu0 %v56
    %255 = vmatprep.subr.mxu0 0.0
    %256 = vmatpush1.msra.mxu0 %v57
    %257 = vmatprep.subr.mxu0 0.0
    %258 = vmatpush1.msra.mxu0 %v58
    %259 = vmatprep.subr.mxu0 0.0
    %260 = vmatpush1.msra.mxu0 %v59
    %261 = vmatprep.subr.mxu0 0.0
    %262 = vmatpush1.msra.mxu0 %v60
    %263 = vmatprep.subr.mxu0 0.0
    %264 = vmatpush1.msra.mxu0 %v61
    %265 = vmatprep.subr.mxu0 0.0
    %266 = vmatpush1.msra.mxu0 %v62
    %267 = vmatprep.subr.mxu0 0.0
    %268 = vmatpush1.msra.mxu0 %v63
    %269 = vmatprep.subr.mxu0 0.0
    %270 = vmatpush1.msra.mxu0 %v64
    %271 = vmatprep.subr.mxu0 0.0
    %272 = vmatpush1.msra.mxu0 %v65
    %273 = vmatprep.subr.mxu0 0.0
    %274 = vmatpush1.msra.mxu0 %v66
    %275 = vmatprep.subr.mxu0 0.0
    %276 = vmatpush1.msra.mxu0 %v67
    %277 = vmatprep.subr.mxu0 0.0
    %278 = vmatpush1.msra.mxu0 %v68
    %279 = vmatprep.mubr.f32.mxu0 %v186
    %280 = vmatmul.mubr.f32.gmra.mrb[0].mxu0 %v178
    %v281 = vpop.f32.mrb[0].mxu0
    %v282 = vadd.f32 %v167, %v281
    %v283 = vpop.f32.mrb[0].mxu0
    %284 = vdwg.mxu0
    %285 = vmatprep.subr.mxu0 0.0
    %286 = vmatpush1.msra.mxu0 %v69
    %287 = vmatprep.subr.mxu0 0.0
    %288 = vmatpush1.msra.mxu0 %v70
    %289 = vmatprep.subr.mxu0 0.0
    %290 = vmatpush1.msra.mxu0 %v71
    %291 = vmatprep.subr.mxu0 0.0
    %292 = vmatpush1.msra.mxu0 %v72
    %293 = vmatprep.subr.mxu0 0.0
    %294 = vmatpush1.msra.mxu0 %v73
    %295 = vmatprep.subr.mxu0 0.0
    %296 = vmatpush1.msra.mxu0 %v74
    %297 = vmatprep.subr.mxu0 0.0
    %298 = vmatpush1.msra.mxu0 %v75
    %299 = vmatprep.subr.mxu0 0.0
    %300 = vmatpush1.msra.mxu0 %v76
    %301 = vmatprep.subr.mxu0 0.0
    %302 = vmatpush1.msra.mxu0 %v77
    %303 = vmatprep.subr.mxu0 0.0
    %304 = vmatpush1.msra.mxu0 %v78
    %305 = vmatprep.subr.mxu0 0.0
    %306 = vmatpush1.msra.mxu0 %v79
    %307 = vmatprep.subr.mxu0 0.0
    %308 = vmatpush1.msra.mxu0 %v80
    %309 = vmatprep.subr.mxu0 0.0
    %310 = vmatpush1.msra.mxu0 %v81
    %311 = vmatprep.subr.mxu0 0.0
    %312 = vmatpush1.msra.mxu0 %v82
    %313 = vmatprep.subr.mxu0 0.0
    %314 = vmatpush1.msra.mxu0 %v83
    %315 = vmatprep.subr.mxu0 0.0
    %316 = vmatpush1.msra.mxu0 %v84
    %317 = vmatprep.subr.mxu0 0.0
    %318 = vmatpush1.msra.mxu0 %v85
    %319 = vmatprep.subr.mxu0 0.0
    %320 = vmatpush1.msra.mxu0 %v86
    %321 = vmatprep.subr.mxu0 0.0
    %322 = vmatpush1.msra.mxu0 %v87
    %323 = vmatprep.subr.mxu0 0.0
    %324 = vmatpush1.msra.mxu0 %v88
    %325 = vmatprep.subr.mxu0 0.0
    %326 = vmatpush1.msra.mxu0 %v89
    %327 = vmatprep.subr.mxu0 0.0
    %328 = vmatpush1.msra.mxu0 %v90
    %329 = vmatprep.subr.mxu0 0.0
    %330 = vmatpush1.msra.mxu0 %v91
    %331 = vmatprep.subr.mxu0 0.0
    %332 = vmatpush1.msra.mxu0 %v92
    %333 = vmatprep.subr.mxu0 0.0
    %334 = vmatpush1.msra.mxu0 %v93
    %335 = vmatprep.subr.mxu0 0.0
    %336 = vmatpush1.msra.mxu0 %v94
    %337 = vmatprep.subr.mxu0 0.0
    %338 = vmatpush1.msra.mxu0 %v95
    %339 = vmatprep.subr.mxu0 0.0
    %340 = vmatpush1.msra.mxu0 %v96
    %341 = vmatprep.subr.mxu0 0.0
    %342 = vmatpush1.msra.mxu0 %v97
    %343 = vmatprep.subr.mxu0 0.0
    %344 = vmatpush1.msra.mxu0 %v98
    %345 = vmatprep.subr.mxu0 0.0
    %346 = vmatpush1.msra.mxu0 %v99
    %347 = vmatprep.subr.mxu0 0.0
    %348 = vmatpush1.msra.mxu0 %v100
    %349 = vmatprep.mubr.f32.mxu0 %v187
    %350 = vmatmul.mubr.f32.gmra.mrb[0].mxu0 %v185
    %v351 = vpop.f32.mrb[0].mxu0
    %v352 = vadd.f32 %v282, %v351
    %v353 = vpop.f32.mrb[0].mxu0
    %354 = vdwg.mxu0
    %355 = vmatprep.subr.mxu0 0.0
    %356 = vmatpush1.msra.mxu0 %v101
    %357 = vmatprep.subr.mxu0 0.0
    %358 = vmatpush1.msra.mxu0 %v102
    %359 = vmatprep.subr.mxu0 0.0
    %360 = vmatpush1.msra.mxu0 %v103
    %361 = vmatprep.subr.mxu0 0.0
    %362 = vmatpush1.msra.mxu0 %v104
    %363 = vmatprep.subr.mxu0 0.0
    %364 = vmatpush1.msra.mxu0 %v105
    %365 = vmatprep.subr.mxu0 0.0
    %366 = vmatpush1.msra.mxu0 %v106
    %367 = vmatprep.subr.mxu0 0.0
    %368 = vmatpush1.msra.mxu0 %v107
    %369 = vmatprep.subr.mxu0 0.0
    %370 = vmatpush1.msra.mxu0 %v108
    %371 = vmatprep.subr.mxu0 0.0
    %372 = vmatpush1.msra.mxu0 %v109
    %373 = vmatprep.subr.mxu0 0.0
    %374 = vmatpush1.msra.mxu0 %v110
    %375 = vmatprep.subr.mxu0 0.0
    %376 = vmatpush1.msra.mxu0 %v111
    %377 = vmatprep.subr.mxu0 0.0
    %378 = vmatpush1.msra.mxu0 %v112
    %379 = vmatprep.subr.mxu0 0.0
    %380 = vmatpush1.msra.mxu0 %v113
    %381 = vmatprep.subr.mxu0 0.0
    %382 = vmatpush1.msra.mxu0 %v114
    %383 = vmatprep.subr.mxu0 0.0
    %384 = vmatpush1.msra.mxu0 %v115
    %385 = vmatprep.subr.mxu0 0.0
    %386 = vmatpush1.msra.mxu0 %v116
    %387 = vmatprep.subr.mxu0 0.0
    %388 = vmatpush1.msra.mxu0 %v117
    %389 = vmatprep.subr.mxu0 0.0
    %390 = vmatpush1.msra.mxu0 %v118
    %391 = vmatprep.subr.mxu0 0.0
    %392 = vmatpush1.msra.mxu0 %v119
    %393 = vmatprep.subr.mxu0 0.0
    %394 = vmatpush1.msra.mxu0 %v120
    %395 = vmatprep.subr.mxu0 0.0
    %396 = vmatpush1.msra.mxu0 %v121
    %397 = vmatprep.subr.mxu0 0.0
    %398 = vmatpush1.msra.mxu0 %v122
    %399 = vmatprep.subr.mxu0 0.0
    %400 = vmatpush1.msra.mxu0 %v123
    %401 = vmatprep.subr.mxu0 0.0
    %402 = vmatpush1.msra.mxu0 %v124
    %403 = vmatprep.subr.mxu0 0.0
    %404 = vmatpush1.msra.mxu0 %v125
    %405 = vmatprep.subr.mxu0 0.0
    %406 = vmatpush1.msra.mxu0 %v126
    %407 = vmatprep.subr.mxu0 0.0
    %408 = vmatpush1.msra.mxu0 %v127
    %409 = vmatprep.subr.mxu0 0.0
    %410 = vmatpush1.msra.mxu0 %v128
    %411 = vmatprep.subr.mxu0 0.0
    %412 = vmatpush1.msra.mxu0 %v129
    %413 = vmatprep.subr.mxu0 0.0
    %414 = vmatpush1.msra.mxu0 %v130
    %415 = vmatprep.subr.mxu0 0.0
    %416 = vmatpush1.msra.mxu0 %v131
    %417 = vmatprep.subr.mxu0 0.0
    %418 = vmatpush1.msra.mxu0 %v132
    %419 = vmatprep.mubr.f32.mxu0 %v203
    %420 = vmatmul.mubr.f32.gmra.mrb[0].mxu0 %v195
    %v421 = vpop.f32.mrb[0].mxu0
    %v422 = vadd.f32 %v352, %v421
    %v423 = vpop.f32.mrb[0].mxu0
    %424 = vdwg.mxu0
    %425 = vmatprep.subr.mxu0 0.0
    %426 = vmatpush1.msra.mxu0 %v133
    %427 = vmatprep.subr.mxu0 0.0
    %428 = vmatpush1.msra.mxu0 %v134
    %429 = vmatprep.subr.mxu0 0.0
    %430 = vmatpush1.msra.mxu0 %v135
    %431 = vmatprep.subr.mxu0 0.0
    %432 = vmatpush1.msra.mxu0 %v136
    %433 = vmatprep.subr.mxu0 0.0
    %434 = vmatpush1.msra.mxu0 %v137
    %435 = vmatprep.subr.mxu0 0.0
    %436 = vmatpush1.msra.mxu0 %v138
    %437 = vmatprep.subr.mxu0 0.0
    %438 = vmatpush1.msra.mxu0 %v139
    %439 = vmatprep.subr.mxu0 0.0
    %440 = vmatpush1.msra.mxu0 %v140
    %441 = vmatprep.subr.mxu0 0.0
    %442 = vmatpush1.msra.mxu0 %v141
    %443 = vmatprep.subr.mxu0 0.0
    %444 = vmatpush1.msra.mxu0 %v142
    %445 = vmatprep.subr.mxu0 0.0
    %446 = vmatpush1.msra.mxu0 %v143
    %447 = vmatprep.subr.mxu0 0.0
    %448 = vmatpush1.msra.mxu0 %v144
    %449 = vmatprep.subr.mxu0 0.0
    %450 = vmatpush1.msra.mxu0 %v145
    %451 = vmatprep.subr.mxu0 0.0
    %452 = vmatpush1.msra.mxu0 %v146
    %453 = vmatprep.subr.mxu0 0.0
    %454 = vmatpush1.msra.mxu0 %v147
    %455 = vmatprep.subr.mxu0 0.0
    %456 = vmatpush1.msra.mxu0 %v148
    %457 = vmatprep.subr.mxu0 0.0
    %458 = vmatpush1.msra.mxu0 %v149
    %459 = vmatprep.subr.mxu0 0.0
    %460 = vmatpush1.msra.mxu0 %v150
    %461 = vmatprep.subr.mxu0 0.0
    %462 = vmatpush1.msra.mxu0 %v151
    %463 = vmatprep.subr.mxu0 0.0
    %464 = vmatpush1.msra.mxu0 %v152
    %465 = vmatprep.subr.mxu0 0.0
    %466 = vmatpush1.msra.mxu0 %v153
    %467 = vmatprep.subr.mxu0 0.0
    %468 = vmatpush1.msra.mxu0 %v154
    %469 = vmatprep.subr.mxu0 0.0
    %470 = vmatpush1.msra.mxu0 %v155
    %471 = vmatprep.subr.mxu0 0.0
    %472 = vmatpush1.msra.mxu0 %v156
    %473 = vmatprep.subr.mxu0 0.0
    %474 = vmatpush1.msra.mxu0 %v157
    %475 = vmatprep.subr.mxu0 0.0
    %476 = vmatpush1.msra.mxu0 %v158
    %477 = vmatprep.subr.mxu0 0.0
    %478 = vmatpush1.msra.mxu0 %v159
    %479 = vmatprep.subr.mxu0 0.0
    %480 = vmatpush1.msra.mxu0 %v160
    %481 = vmatprep.subr.mxu0 0.0
    %482 = vmatpush1.msra.mxu0 %v161
    %483 = vmatprep.subr.mxu0 0.0
    %484 = vmatpush1.msra.mxu0 0.0
    %485 = vmatprep.subr.mxu0 0.0
    %486 = vmatpush1.msra.mxu0 0.0
    %487 = vmatprep.subr.mxu0 0.0
    %488 = vmatpush1.msra.mxu0 0.0
    %489 = vmatprep.mubr.f32.mxu0 %v213
    %490 = vmatmul.mubr.f32.gmra.mrb[0].mxu0 %v202
    %v491 = vpop.f32.mrb[0].mxu0
    %v492 = vadd.f32 %v422, %v491
    %v493 = vpop.f32.mrb[0].mxu0
    %494 = vdwg.mxu0
    %v495 = vmax.f32 %v492, 0.0
    %v496 = vld [vmem:[%s3] sm:$0xff]
    %v497 = vld [vmem:[%s3 + $0x8] sm:$0xff]
    %v498 = vld [vmem:[%s3 + $0x10] sm:$0xff]
    %v499 = vld [vmem:[%s3 + $0x18] sm:$0xff]
    %v500 = vld [vmem:[%s3 + $0x20] sm:$0xff]
    %v501 = vld [vmem:[%s3 + $0x28] sm:$0xff]
    %v502 = vld [vmem:[%s3 + $0x30] sm:$0xff]
    %v503 = vld [vmem:[%s3 + $0x38] sm:$0xff]
    %v504 = vld [vmem:[%s3 + $0x40] sm:$0xff]
    %v505 = vld [vmem:[%s3 + $0x48] sm:$0xff]
    %v506 = vld [vmem:[%s3 + $0x50] sm:$0xff]
    %v507 = vld [vmem:[%s3 + $0x58] sm:$0xff]
    %v508 = vld [vmem:[%s3 + $0x60] sm:$0xff]
    %v509 = vld [vmem:[%s3 + $0x68] sm:$0xff]
    %v510 = vld [vmem:[%s3 + $0x70] sm:$0xff]
    %v511 = vld [vmem:[%s3 + $0x78] sm:$0xff]
    %v512 = vld [vmem:[%s4] sm:$0x1]
    %v514 = vlaneseq
    %v515 = vshrl.u32 %v514, 7
    %v516 = vsub.s32 0, %v515
    %v517 = vrot.slane %v512, %v516
    %519 = vmatprep.subr.mxu0 0.0
    %520 = vmatpush1.msra.mxu0 %v496
    %521 = vmatprep.subr.mxu0 0.0
    %522 = vmatpush1.msra.mxu0 %v497
    %523 = vmatprep.subr.mxu0 0.0
    %524 = vmatpush1.msra.mxu0 %v498
    %525 = vmatprep.subr.mxu0 0.0
    %526 = vmatpush1.msra.mxu0 %v499
    %527 = vmatprep.subr.mxu0 0.0
    %528 = vmatpush1.msra.mxu0 %v500
    %529 = vmatprep.subr.mxu0 0.0
    %530 = vmatpush1.msra.mxu0 %v501
    %531 = vmatprep.subr.mxu0 0.0
    %532 = vmatpush1.msra.mxu0 %v502
    %533 = vmatprep.subr.mxu0 0.0
    %534 = vmatpush1.msra.mxu0 %v503
    %535 = vmatprep.subr.mxu0 0.0
    %536 = vmatpush1.msra.mxu0 %v504
    %537 = vmatprep.subr.mxu0 0.0
    %538 = vmatpush1.msra.mxu0 %v505
    %539 = vmatprep.subr.mxu0 0.0
    %540 = vmatpush1.msra.mxu0 %v506
    %541 = vmatprep.subr.mxu0 0.0
    %542 = vmatpush1.msra.mxu0 %v507
    %543 = vmatprep.subr.mxu0 0.0
    %544 = vmatpush1.msra.mxu0 %v508
    %545 = vmatprep.subr.mxu0 0.0
    %546 = vmatpush1.msra.mxu0 %v509
    %547 = vmatprep.subr.mxu0 0.0
    %548 = vmatpush1.msra.mxu0 %v510
    %549 = vmatprep.subr.mxu0 0.0
    %550 = vmatpush1.msra.mxu0 %v511
    %551 = vmatprep.subr.mxu0 0.0
    %552 = vmatpush1.msra.mxu0 0.0
    %553 = vmatprep.subr.mxu0 0.0
    %554 = vmatpush1.msra.mxu0 0.0
    %555 = vmatprep.subr.mxu0 0.0
    %556 = vmatpush1.msra.mxu0 0.0
    %557 = vmatprep.subr.mxu0 0.0
    %558 = vmatpush1.msra.mxu0 0.0
    %559 = vmatprep.subr.mxu0 0.0
    %560 = vmatpush1.msra.mxu0 0.0
    %561 = vmatprep.subr.mxu0 0.0
    %562 = vmatpush1.msra.mxu0 0.0
    %563 = vmatprep.subr.mxu0 0.0
    %564 = vmatpush1.msra.mxu0 0.0
    %565 = vmatprep.subr.mxu0 0.0
    %566 = vmatpush1.msra.mxu0 0.0
    %567 = vmatprep.subr.mxu0 0.0
    %568 = vmatpush1.msra.mxu0 0.0
    %569 = vmatprep.subr.mxu0 0.0
    %570 = vmatpush1.msra.mxu0 0.0
    %571 = vmatprep.subr.mxu0 0.0
    %572 = vmatpush1.msra.mxu0 0.0
    %573 = vmatprep.subr.mxu0 0.0
    %574 = vmatpush1.msra.mxu0 0.0
    %575 = vmatprep.subr.mxu0 0.0
    %576 = vmatpush1.msra.mxu0 0.0
    %577 = vmatprep.subr.mxu0 0.0
    %578 = vmatpush1.msra.mxu0 0.0
    %579 = vmatprep.subr.mxu0 0.0
    %580 = vmatpush1.msra.mxu0 0.0
    %581 = vmatprep.subr.mxu0 0.0
    %582 = vmatpush1.msra.mxu0 0.0
    %583 = vmatprep.mubr.f32.mxu0 0.0
    %584 = vmatmul.mubr.f32.gmra.mrb[0].mxu0 %v495
    %v585 = vpop.f32.mrb[0].mxu0
    %v586 = vadd.f32 %v517, %v585
    %v587 = vpop.f32.mrb[0].mxu0
    %588 = vdwg.mxu0
    %vm589 = vcmask 50176
    %590 = vst.msk [vmem:[#allocation5] sm:$0x3] %vm589, %v586
    // Predicated region
    $region26: #{tpu_custom_call.1} parent=1 // pred_check
      _
    $region27: #{tpu_custom_call.1} parent=1 // pred_check_branch
      %592 = sbr.rel (0) target = $region29
    $region28: #{tpu_custom_call.1} parent=1 // pred_region
      %s594 = ssub.s32 32, 32
      %595 = vsyncadd [#allocation4], %s594
      %s597 = sshll.u32 [#allocation5], 4
      %s598 = int_to_ptr.vmem [resolvable:$true] %s597
      %600 = dma.vmem_to_hbm [thread:$0]  %s598, 32, %s5, [#allocation4]
    $region29: #{tpu_custom_call.1} parent=1 // pred_fallthru
      _
    // Predicated region
    $region30: #{tpu_custom_call.1} parent=1 // pred_check
      _
    $region31: #{tpu_custom_call.1} parent=1 // pred_check_branch
      %602 = sbr.rel (0) target = $region33
    $region32: #{tpu_custom_call.1} parent=1 // pred_region
      %603 = dma.done [#allocation4], 32
    $region33: #{tpu_custom_call.1} parent=1 // pred_fallthru
      _
    %604 = vsyncpa [#allocation3], 1
    %605 = vsyncpa [#allocation4], 1

</llo_original>
